<compile_context>
chip_gen: v5e
topology: v5e:2x2
jax: 0.10.0
libtpu: 0.0.40
codegen_flags: <defaults>
</compile_context>

<pallas_src>
import jax
import jax.numpy as jnp
from jax.experimental import pallas as pl
from jax.experimental.pallas import tpu as pltpu

NEG_SLOPE = 0.01                      # nn.LeakyReLU default
_VMEM_BUDGET = 24 * 1024 * 1024       # headroom under the 32 MiB scoped-VMEM request


def _leaky_relu(x):
    return jnp.where(x > 0, x, NEG_SLOPE * x)


def _log1p_accurate(x):
    # Accurate log(1 + x) for small x using the classic u-trick; avoids relying
    # on a dedicated log1p lowering. Dummy branches are NaN/Inf free.
    u = 1.0 + x
    denom = jnp.where(u == 1.0, 1.0, u - 1.0)
    return jnp.where(u == 1.0, x, jnp.log(u) * (x / denom))


def _round_up(x, m):
    return ((x + m - 1) // m) * m


def univerifier_kernel(z_ref, w1_ref, b1_ref, w2_ref, b2_ref, wd_ref, bd_ref,
                       out_ref):
    # z tile arrives in f32 straight from HBM; cast to bf16 here (VPU work that
    # hides under the DMA / MXU).
    zb = z_ref[...].astype(jnp.bfloat16)                         # (TB, in_dim)

    # Layer 1, feature-major: (128, in_dim) @ (TB, in_dim)^T -> (128, TB),
    # f32 accumulate (flash-attention-style A @ B^T contraction).
    h1 = jax.lax.dot_general(
        w1_ref[...], zb,
        dimension_numbers=(((1,), (1,)), ((), ())),
        preferred_element_type=jnp.float32) + b1_ref[...]
    h1 = _leaky_relu(h1)                                         # f32, VPU

    # Layer 2: (64, 128) @ (128, TB) -> (64, TB).
    h2 = jnp.dot(w2_ref[...], h1.astype(jnp.bfloat16),
                 preferred_element_type=jnp.float32) + b2_ref[...]
    h2 = _leaky_relu(h2)                                         # f32

    # Layer 3 reduced to the logit difference:
    #   d = <h2, w3[1]-w3[0]> + (b3[1]-b3[0]),  shape (1, TB), f32 throughout.
    d = jnp.dot(wd_ref[...], h2,
                preferred_element_type=jnp.float32) + bd_ref[...]

    # Analytic 2-class log_softmax: out0 = -softplus(d), out1 = d - softplus(d).
    sp = jnp.maximum(d, 0.0) + _log1p_accurate(jnp.exp(-jnp.abs(d)))
    out_ref[...] = jnp.concatenate([-sp, d - sp], axis=0).astype(out_ref.dtype)


def _choose_tile(B, in_dim, block_rows):
    """Pick the batch tile TB and grid size."""
    if B <= 256:
        # One exact block (block dims == array dims): no padding, no masking.
        return B, 1
    # VMEM-aware cap: double-buffered f32 z block + f32/bf16 hidden temporaries.
    per_row = 2 * in_dim * 4 + (128 * 4 + 128 * 2 + 64 * 4 + 64 * 4)
    vmem_cap = max(128, (_VMEM_BUDGET // per_row) // 128 * 128)
    cap = max(128, min(block_rows, vmem_cap) // 128 * 128)
    # TB multiple of 128 (lane dim of the (2, TB) output block, legal even for
    # ragged last blocks) and >= 2 grid steps so both v7x TensorCores get work.
    tb = min(cap, _round_up(pl.cdiv(B, 2), 128))
    return tb, pl.cdiv(B, tb)


def univerifier_forward(z, params, block_rows=4096):
    """z: (B, in_dim) float32.
    params (PyTorch layout): w1 (128,in_dim), b1 (128,), w2 (64,128), b2 (64,),
    w3 (2,64), b3 (2,). Returns (B, 2) float32 log-probabilities."""
    B, in_dim = z.shape
    TB, num_blocks = _choose_tile(B, in_dim, block_rows)

    # MXU operands in bf16; biases and the tiny final layer stay f32.
    w1 = params["w1"].astype(jnp.bfloat16)                  # (128, in_dim)
    w2 = params["w2"].astype(jnp.bfloat16)                  # (64, 128)
    b1 = params["b1"].astype(jnp.float32).reshape(128, 1)
    b2 = params["b2"].astype(jnp.float32).reshape(64, 1)
    w3 = params["w3"].astype(jnp.float32)                   # (2, 64)
    b3 = params["b3"].astype(jnp.float32)                   # (2,)
    wd = (w3[1] - w3[0]).reshape(1, 64)                     # logit-difference weights
    bd = (b3[1] - b3[0]).reshape(1, 1)

    flops = 2 * B * (in_dim * 128 + 128 * 64 + 64)
    bytes_accessed = (B * in_dim * 4                         # z (f32, streamed)
                      + B * 2 * 4                            # out (f32)
                      + (w1.size + w2.size) * 2
                      + (b1.size + b2.size + wd.size + bd.size) * 4)

    out_t = pl.pallas_call(
        univerifier_kernel,
        out_shape=jax.ShapeDtypeStruct((2, B), jnp.float32),
        grid=(num_blocks,),
        in_specs=[
            pl.BlockSpec((TB, in_dim), lambda i: (i, 0)),    # streamed z (f32)
            pl.BlockSpec(w1.shape, lambda i: (0, 0)),        # VMEM-resident params
            pl.BlockSpec(b1.shape, lambda i: (0, 0)),
            pl.BlockSpec(w2.shape, lambda i: (0, 0)),
            pl.BlockSpec(b2.shape, lambda i: (0, 0)),
            pl.BlockSpec(wd.shape, lambda i: (0, 0)),
            pl.BlockSpec(bd.shape, lambda i: (0, 0)),
        ],
        out_specs=pl.BlockSpec((2, TB), lambda i: (0, i)),   # lane-dense output
        compiler_params=pltpu.CompilerParams(
            dimension_semantics=("parallel",),
            vmem_limit_bytes=32 * 1024 * 1024),
        cost_estimate=pl.CostEstimate(
            flops=flops, transcendentals=2 * B,
            bytes_accessed=bytes_accessed),
    )(z.astype(jnp.float32), w1, b1, w2, b2, wd, bd)

    # Tiny (2, B) -> (B, 2) relayout in the wrapper (8*B bytes).
    return out_t.T


def init_params(key, in_dim):
    """Deterministic synthetic init (PyTorch-style uniform fan-in scaling),
    stored in PyTorch (out_features, in_features) layout."""
    ks = jax.random.split(key, 6)

    def lin(kw, kb, fan_in, fan_out):
        bound = 1.0 / jnp.sqrt(fan_in)
        w = jax.random.uniform(kw, (fan_out, fan_in), jnp.float32, -bound, bound)
        b = jax.random.uniform(kb, (fan_out,), jnp.float32, -bound, bound)
        return w, b

    w1, b1 = lin(ks[0], ks[1], in_dim, 128)
    w2, b2 = lin(ks[2], ks[3], 128, 64)
    w3, b3 = lin(ks[4], ks[5], 64, 2)
    return dict(w1=w1, b1=b1, w2=w2, b2=b2, w3=w3, b3=b3)


def reference_forward(z, p):
    """Pure-JAX reference with the same bf16-operand / f32-accumulate recipe.
    (True fp32 PyTorch parity is ~1e-2 level because of the bf16 matmuls.)"""
    zb = z.astype(jnp.bfloat16)
    w1 = p["w1"].astype(jnp.bfloat16)
    w2 = p["w2"].astype(jnp.bfloat16)
    h1 = _leaky_relu(jnp.dot(zb, w1.T, preferred_element_type=jnp.float32)
                     + p["b1"][None, :])
    h2 = _leaky_relu(jnp.dot(h1.astype(jnp.bfloat16), w2.T,
                             preferred_element_type=jnp.float32)
                     + p["b2"][None, :])
    logits = jnp.dot(h2, p["w3"].T,
                     preferred_element_type=jnp.float32) + p["b3"][None, :]
    return jax.nn.log_softmax(logits, axis=-1)


if __name__ == "__main__":
    key = jax.random.PRNGKey(0)
    k_param, k_small, k_big = jax.random.split(key, 3)

    IN_DIM = 32
    params = init_params(k_param, IN_DIM)

    # Small single-block case (block dims == array dims).
    z_small = jax.random.normal(k_small, (8, IN_DIM), jnp.float32)
    out_small = jax.block_until_ready(univerifier_forward(z_small, params))
    ref_small = reference_forward(z_small, params)
    assert out_small.shape == (8, 2)
    assert jnp.allclose(out_small, ref_small, atol=1e-3, rtol=1e-3), "small mismatch"
    assert jnp.allclose(jnp.sum(jnp.exp(out_small), axis=-1), 1.0, atol=1e-4)

    # Multi-block case with a ragged last tile (exercises grid + masking path).
    z_big = jax.random.normal(k_big, (300, IN_DIM), jnp.float32)
    out_big = jax.block_until_ready(univerifier_forward(z_big, params))
    ref_big = reference_forward(z_big, params)
    assert out_big.shape == (300, 2)
    assert jnp.allclose(out_big, ref_big, atol=1e-3, rtol=1e-3), "big mismatch"
    assert jnp.allclose(jnp.sum(jnp.exp(out_big), axis=-1), 1.0, atol=1e-4)

    print("KERNEL_OK")
</pallas_src>

<mosaic_0001>
module attributes {stable_mosaic.version = 11 : i64} {
  func.func @univerifier_kernel(%arg0: i32, %arg1: memref<8x32xf32, #tpu.memory_space<vmem>>, %arg2: memref<128x32xbf16, #tpu.memory_space<vmem>>, %arg3: memref<128x1xf32, #tpu.memory_space<vmem>>, %arg4: memref<64x128xbf16, #tpu.memory_space<vmem>>, %arg5: memref<64x1xf32, #tpu.memory_space<vmem>>, %arg6: memref<1x64xf32, #tpu.memory_space<vmem>>, %arg7: memref<1x1xf32, #tpu.memory_space<vmem>>, %arg8: memref<2x8xf32, #tpu.memory_space<vmem>>) attributes {dimension_semantics = [#tpu.dimension_semantics<parallel>], iteration_bounds = array<i64: 1>, scalar_prefetch = 0 : i64, scratch_operands = 0 : i64, tpu.core_type = #tpu.core_type<tc>, window_params = [{transform_indices = @transform_0, window_bounds = array<i64: 8, 32>}, {pipeline_mode = #tpu.pipeline_mode<synchronous>, transform_indices = @transform_1, window_bounds = array<i64: 128, 32>}, {pipeline_mode = #tpu.pipeline_mode<synchronous>, transform_indices = @transform_2, window_bounds = array<i64: 128, 1>}, {pipeline_mode = #tpu.pipeline_mode<synchronous>, transform_indices = @transform_3, window_bounds = array<i64: 64, 128>}, {pipeline_mode = #tpu.pipeline_mode<synchronous>, transform_indices = @transform_4, window_bounds = array<i64: 64, 1>}, {pipeline_mode = #tpu.pipeline_mode<synchronous>, transform_indices = @transform_5, window_bounds = array<i64: 1, 64>}, {pipeline_mode = #tpu.pipeline_mode<synchronous>, transform_indices = @transform_6, window_bounds = array<i64: 1, 1>}, {transform_indices = @transform_7, window_bounds = array<i64: 2, 8>}]} {
    %c0 = arith.constant 0 : index
    %c0_0 = arith.constant 0 : index
    %0 = vector.load %arg1[%c0, %c0_0] : memref<8x32xf32, #tpu.memory_space<vmem>>, vector<8x32xf32>
    %1 = arith.truncf %0 : vector<8x32xf32> to vector<8x32xbf16>
    %c0_1 = arith.constant 0 : index
    %c0_2 = arith.constant 0 : index
    %2 = vector.load %arg2[%c0_1, %c0_2] : memref<128x32xbf16, #tpu.memory_space<vmem>>, vector<128x32xbf16>
    %cst = arith.constant dense<0.000000e+00> : vector<128x8xf32>
    %3 = tpu.matmul %2, %1, %cst {dimension_numbers = #tpu.dot_dimension_numbers<[1], [1], [0], [0], [0, 0, 1, 0], [], []>} : vector<128x32xbf16>, vector<8x32xbf16>, vector<128x8xf32> -> vector<128x8xf32>
    %c0_3 = arith.constant 0 : index
    %c0_4 = arith.constant 0 : index
    %4 = vector.load %arg3[%c0_3, %c0_4] : memref<128x1xf32, #tpu.memory_space<vmem>>, vector<128x1xf32>
    %5 = vector.broadcast %4 : vector<128x1xf32> to vector<128x8xf32>
    %6 = arith.addf %3, %5 : vector<128x8xf32>
    %cst_5 = arith.constant 0.000000e+00 : f32
    %7 = vector.broadcast %cst_5 : f32 to vector<128x8xf32>
    %8 = arith.cmpf ogt, %6, %7 : vector<128x8xf32>
    %cst_6 = arith.constant 0.00999999977 : f32
    %9 = vector.broadcast %cst_6 : f32 to vector<128x8xf32>
    %10 = arith.mulf %9, %6 : vector<128x8xf32>
    %11 = arith.select %8, %6, %10 : vector<128x8xi1>, vector<128x8xf32>
    %c0_7 = arith.constant 0 : index
    %c0_8 = arith.constant 0 : index
    %12 = vector.load %arg4[%c0_7, %c0_8] : memref<64x128xbf16, #tpu.memory_space<vmem>>, vector<64x128xbf16>
    %13 = arith.truncf %11 : vector<128x8xf32> to vector<128x8xbf16>
    %cst_9 = arith.constant dense<0.000000e+00> : vector<64x8xf32>
    %14 = tpu.matmul %12, %13, %cst_9 {dimension_numbers = #tpu.dot_dimension_numbers<[1], [0], [0], [1], [0, 0, 1, 1], [], []>} : vector<64x128xbf16>, vector<128x8xbf16>, vector<64x8xf32> -> vector<64x8xf32>
    %c0_10 = arith.constant 0 : index
    %c0_11 = arith.constant 0 : index
    %15 = vector.load %arg5[%c0_10, %c0_11] : memref<64x1xf32, #tpu.memory_space<vmem>>, vector<64x1xf32>
    %16 = vector.broadcast %15 : vector<64x1xf32> to vector<64x8xf32>
    %17 = arith.addf %14, %16 : vector<64x8xf32>
    %cst_12 = arith.constant 0.000000e+00 : f32
    %18 = vector.broadcast %cst_12 : f32 to vector<64x8xf32>
    %19 = arith.cmpf ogt, %17, %18 : vector<64x8xf32>
    %cst_13 = arith.constant 0.00999999977 : f32
    %20 = vector.broadcast %cst_13 : f32 to vector<64x8xf32>
    %21 = arith.mulf %20, %17 : vector<64x8xf32>
    %22 = arith.select %19, %17, %21 : vector<64x8xi1>, vector<64x8xf32>
    %c0_14 = arith.constant 0 : index
    %c0_15 = arith.constant 0 : index
    %23 = vector.load %arg6[%c0_14, %c0_15] : memref<1x64xf32, #tpu.memory_space<vmem>>, vector<1x64xf32>
    %cst_16 = arith.constant dense<0.000000e+00> : vector<1x8xf32>
    %24 = tpu.matmul %23, %22, %cst_16 {dimension_numbers = #tpu.dot_dimension_numbers<[1], [0], [0], [1], [0, 0, 1, 1], [], []>} : vector<1x64xf32>, vector<64x8xf32>, vector<1x8xf32> -> vector<1x8xf32>
    %c0_17 = arith.constant 0 : index
    %c0_18 = arith.constant 0 : index
    %25 = vector.load %arg7[%c0_17, %c0_18] : memref<1x1xf32, #tpu.memory_space<vmem>>, vector<1x1xf32>
    %26 = vector.broadcast %25 : vector<1x1xf32> to vector<1x8xf32>
    %27 = arith.addf %24, %26 : vector<1x8xf32>
    %cst_19 = arith.constant 0.000000e+00 : f32
    %28 = vector.broadcast %cst_19 : f32 to vector<1x8xf32>
    %29 = arith.maximumf %27, %28 : vector<1x8xf32>
    %30 = math.absf %27 : vector<1x8xf32>
    %cst_20 = arith.constant 0.000000e+00 : f32
    %31 = vector.broadcast %cst_20 : f32 to vector<1x8xf32>
    %32 = arith.subf %31, %30 : vector<1x8xf32>
    %33 = math.exp %32 : vector<1x8xf32>
    %cst_21 = arith.constant 1.000000e+00 : f32
    %34 = vector.broadcast %cst_21 : f32 to vector<1x8xf32>
    %35 = arith.addf %34, %33 : vector<1x8xf32>
    %cst_22 = arith.constant 1.000000e+00 : f32
    %36 = vector.broadcast %cst_22 : f32 to vector<1x8xf32>
    %37 = arith.cmpf oeq, %35, %36 : vector<1x8xf32>
    %cst_23 = arith.constant 1.000000e+00 : f32
    %38 = vector.broadcast %cst_23 : f32 to vector<1x8xf32>
    %39 = arith.subf %35, %38 : vector<1x8xf32>
    %cst_24 = arith.constant 1.000000e+00 : f32
    %40 = vector.broadcast %cst_24 : f32 to vector<1x8xf32>
    %41 = arith.select %37, %40, %39 : vector<1x8xi1>, vector<1x8xf32>
    %cst_25 = arith.constant 1.000000e+00 : f32
    %42 = vector.broadcast %cst_25 : f32 to vector<1x8xf32>
    %43 = arith.cmpf oeq, %35, %42 : vector<1x8xf32>
    %44 = math.log %35 : vector<1x8xf32>
    %45 = arith.divf %33, %41 : vector<1x8xf32>
    %46 = arith.mulf %44, %45 : vector<1x8xf32>
    %47 = arith.select %43, %33, %46 : vector<1x8xi1>, vector<1x8xf32>
    %48 = arith.addf %29, %47 : vector<1x8xf32>
    %cst_26 = arith.constant 0.000000e+00 : f32
    %49 = vector.broadcast %cst_26 : f32 to vector<1x8xf32>
    %50 = arith.subf %49, %48 : vector<1x8xf32>
    %51 = arith.subf %27, %48 : vector<1x8xf32>
    %52 = tpu.concatenate %50, %51 in 0 : vector<1x8xf32>, vector<1x8xf32> -> vector<2x8xf32>
    %c0_27 = arith.constant 0 : index
    %c0_28 = arith.constant 0 : index
    %53 = vector.load %arg8[%c0_27, %c0_28] : memref<2x8xf32, #tpu.memory_space<vmem>>, vector<2x8xf32>
    tpu.vector_store %arg8[%c0_27, %c0_28], %52 {strides = array<i32>} : memref<2x8xf32, #tpu.memory_space<vmem>>, vector<2x8xf32>,
    return
  }
  func.func @transform_0(%arg0: i32) -> (i32, i32) {
    %c0_i32 = arith.constant 0 : i32
    %c0_i32_0 = arith.constant 0 : i32
    return %arg0, %c0_i32 : i32, i32
  }
  func.func @transform_1(%arg0: i32) -> (i32, i32) {
    %c0_i32 = arith.constant 0 : i32
    %c0_i32_0 = arith.constant 0 : i32
    %c0_i32_1 = arith.constant 0 : i32
    return %c0_i32, %c0_i32_0 : i32, i32
  }
  func.func @transform_2(%arg0: i32) -> (i32, i32) {
    %c0_i32 = arith.constant 0 : i32
    %c0_i32_0 = arith.constant 0 : i32
    %c0_i32_1 = arith.constant 0 : i32
    return %c0_i32, %c0_i32_0 : i32, i32
  }
  func.func @transform_3(%arg0: i32) -> (i32, i32) {
    %c0_i32 = arith.constant 0 : i32
    %c0_i32_0 = arith.constant 0 : i32
    %c0_i32_1 = arith.constant 0 : i32
    return %c0_i32, %c0_i32_0 : i32, i32
  }
  func.func @transform_4(%arg0: i32) -> (i32, i32) {
    %c0_i32 = arith.constant 0 : i32
    %c0_i32_0 = arith.constant 0 : i32
    %c0_i32_1 = arith.constant 0 : i32
    return %c0_i32, %c0_i32_0 : i32, i32
  }
  func.func @transform_5(%arg0: i32) -> (i32, i32) {
    %c0_i32 = arith.constant 0 : i32
    %c0_i32_0 = arith.constant 0 : i32
    %c0_i32_1 = arith.constant 0 : i32
    return %c0_i32, %c0_i32_0 : i32, i32
  }
  func.func @transform_6(%arg0: i32) -> (i32, i32) {
    %c0_i32 = arith.constant 0 : i32
    %c0_i32_0 = arith.constant 0 : i32
    %c0_i32_1 = arith.constant 0 : i32
    return %c0_i32, %c0_i32_0 : i32, i32
  }
  func.func @transform_7(%arg0: i32) -> (i32, i32) {
    %c0_i32 = arith.constant 0 : i32
    %c0_i32_0 = arith.constant 0 : i32
    return %c0_i32, %arg0 : i32, i32
  }
}

</mosaic_0001>

<llo_original>
// kernel: tpu_custom_call.1
$region0: #{tpu_custom_call.1}
  #allocation0 [shape = 'u32[]', space=smem, size = 0x4, offset = 0x4, fixed_abs, tag = 'smem constant byte address 0x4 - core index']
  #allocation1 [shape = 'u32[72,128]{1,0:T(1,128)}', space=vmem, size = 0x9000, scoped, tag = 'internal scratch']
  #allocation2 [shape = 'f32[1,1]{1,0:T(1,128)S(1)}', space=vmem, size = 0x200, scoped, tag = 'scoped memory for tpu_custom_call.1']
  %s0 = inlined_call_operand.vmem [shape: f32[8,32], index: 0, kind: input, shape index: {}]
  %s1 = inlined_call_operand.vmem [shape: bf16[128,32], index: 1, kind: input, shape index: {}]
  %s2 = inlined_call_operand.vmem [shape: f32[128,1], index: 2, kind: input, shape index: {}]
  %s3 = inlined_call_operand.vmem [shape: bf16[64,128], index: 3, kind: input, shape index: {}]
  %s4 = inlined_call_operand.vmem [shape: f32[64,1], index: 4, kind: input, shape index: {}]
  %s5 = inlined_call_operand.vmem [shape: f32[1,64], index: 5, kind: input, shape index: {}]
  %s6 = inlined_call_operand.<no memory space> [shape: f32[1,1], index: 6, kind: input, shape index: {}]
  %s7 = inlined_call_operand.hbm [shape: f32[2,8], index: 7, kind: output, shape index: {}]
  %s8 = sld [smem:[#allocation0]]
  $region38: #{tpu_custom_call.1} parent=0
    _
  %s10 = ssub.s32 1, %s8
  %s11 = scalar_select 0, %s10, %s8
  %v12 = vstv %s6
  %13 = vst [vmem:[#allocation2] sm:$0x1] %v12
  $region1: #{tpu_custom_call.1} parent=0
    #allocation3 [shape = 'u8[1024]{0}', space=vmem, size = 0x400, scoped, tag = 'output window, operand 0, single buffered']
    #allocation4 [shape = 's32[1]{0}', space=sflag, size = 0x4, scoped, tag = 'scoped memory for tpu_custom_call.1']
    %14 = vsyncpa [#allocation4], 0
    // Predicated region
    $region2: #{tpu_custom_call.1} parent=1 // pred_check
      _
    $region3: #{tpu_custom_call.1} parent=1 // pred_check_branch
      %16 = sbr.rel (0) target = $region5
    $region4: #{tpu_custom_call.1} parent=1 // pred_region
      _
    $region5: #{tpu_custom_call.1} parent=1 // pred_fallthru
      _
    // Predicated region
    $region6: #{tpu_custom_call.1} parent=1 // pred_check
      _
    $region7: #{tpu_custom_call.1} parent=1 // pred_check_branch
      %18 = sbr.rel (0) target = $region9
    $region8: #{tpu_custom_call.1} parent=1 // pred_region
      _
    $region9: #{tpu_custom_call.1} parent=1 // pred_fallthru
      _
    // Predicated region
    $region10: #{tpu_custom_call.1} parent=1 // pred_check
      _
    $region11: #{tpu_custom_call.1} parent=1 // pred_check_branch
      %20 = sbr.rel (0) target = $region13
    $region12: #{tpu_custom_call.1} parent=1 // pred_region
      _
    $region13: #{tpu_custom_call.1} parent=1 // pred_fallthru
      _
    // Predicated region
    $region14: #{tpu_custom_call.1} parent=1 // pred_check
      _
    $region15: #{tpu_custom_call.1} parent=1 // pred_check_branch
      %22 = sbr.rel (0) target = $region17
    $region16: #{tpu_custom_call.1} parent=1 // pred_region
      _
    $region17: #{tpu_custom_call.1} parent=1 // pred_fallthru
      _
    // Predicated region
    $region18: #{tpu_custom_call.1} parent=1 // pred_check
      _
    $region19: #{tpu_custom_call.1} parent=1 // pred_check_branch
      %24 = sbr.rel (0) target = $region21
    $region20: #{tpu_custom_call.1} parent=1 // pred_region
      _
    $region21: #{tpu_custom_call.1} parent=1 // pred_fallthru
      _
    // Predicated region
    $region22: #{tpu_custom_call.1} parent=1 // pred_check
      _
    $region23: #{tpu_custom_call.1} parent=1 // pred_check_branch
      %26 = sbr.rel (0) target = $region25
    $region24: #{tpu_custom_call.1} parent=1 // pred_region
      _
    $region25: #{tpu_custom_call.1} parent=1 // pred_fallthru
      _
    // Predicated region
    $region26: #{tpu_custom_call.1} parent=1 // pred_check
      _
    $region27: #{tpu_custom_call.1} parent=1 // pred_check_branch
      %28 = sbr.rel (0) target = $region29
    $region28: #{tpu_custom_call.1} parent=1 // pred_region
      _
    $region29: #{tpu_custom_call.1} parent=1 // pred_fallthru
      _
    %v30 = vld [vmem:[%s0] sm:$0xff]
    %v31 = vpack.c.bf16 %v30, %v30
    %v32 = vld [vmem:[%s1] sm:$0xf]
    %v33 = vld [vmem:[%s1 + $0x4] sm:$0xf]
    %v34 = vld [vmem:[%s1 + $0x8] sm:$0xf]
    %v35 = vld [vmem:[%s1 + $0xc] sm:$0xf]
    %v36 = vld [vmem:[%s1 + $0x10] sm:$0xf]
    %v37 = vld [vmem:[%s1 + $0x14] sm:$0xf]
    %v38 = vld [vmem:[%s1 + $0x18] sm:$0xf]
    %v39 = vld [vmem:[%s1 + $0x1c] sm:$0xf]
    %v40 = vld [vmem:[%s1 + $0x20] sm:$0xf]
    %v41 = vld [vmem:[%s1 + $0x24] sm:$0xf]
    %v42 = vld [vmem:[%s1 + $0x28] sm:$0xf]
    %v43 = vld [vmem:[%s1 + $0x2c] sm:$0xf]
    %v44 = vld [vmem:[%s1 + $0x30] sm:$0xf]
    %v45 = vld [vmem:[%s1 + $0x34] sm:$0xf]
    %v46 = vld [vmem:[%s1 + $0x38] sm:$0xf]
    %v47 = vld [vmem:[%s1 + $0x3c] sm:$0xf]
    %v48 = vld [vmem:[%s2] sm:$0xff]
    %v49 = vld [vmem:[%s2 + $0x8] sm:$0xff]
    %v50 = vld [vmem:[%s2 + $0x10] sm:$0xff]
    %v51 = vld [vmem:[%s2 + $0x18] sm:$0xff]
    %v52 = vld [vmem:[%s2 + $0x20] sm:$0xff]
    %v53 = vld [vmem:[%s2 + $0x28] sm:$0xff]
    %v54 = vld [vmem:[%s2 + $0x30] sm:$0xff]
    %v55 = vld [vmem:[%s2 + $0x38] sm:$0xff]
    %v56 = vld [vmem:[%s2 + $0x40] sm:$0xff]
    %v57 = vld [vmem:[%s2 + $0x48] sm:$0xff]
    %v58 = vld [vmem:[%s2 + $0x50] sm:$0xff]
    %v59 = vld [vmem:[%s2 + $0x58] sm:$0xff]
    %v60 = vld [vmem:[%s2 + $0x60] sm:$0xff]
    %v61 = vld [vmem:[%s2 + $0x68] sm:$0xff]
    %v62 = vld [vmem:[%s2 + $0x70] sm:$0xff]
    %v63 = vld [vmem:[%s2 + $0x78] sm:$0xff]
    %65 = vset.pattern.permute.xlu0 0
    %66 = vperm.xlu0 %65, %v48
    %v67 = vpop.permute.xlu0 %66
    %70 = vset.pattern.permute.xlu0 0
    %71 = vperm.xlu0 %70, %v49
    %v72 = vpop.permute.xlu0 %71
    %75 = vset.pattern.permute.xlu0 0
    %76 = vperm.xlu0 %75, %v50
    %v77 = vpop.permute.xlu0 %76
    %80 = vset.pattern.permute.xlu0 0
    %81 = vperm.xlu0 %80, %v51
    %v82 = vpop.permute.xlu0 %81
    %85 = vset.pattern.permute.xlu0 0
    %86 = vperm.xlu0 %85, %v52
    %v87 = vpop.permute.xlu0 %86
    %90 = vset.pattern.permute.xlu0 0
    %91 = vperm.xlu0 %90, %v53
    %v92 = vpop.permute.xlu0 %91
    %95 = vset.pattern.permute.xlu0 0
    %96 = vperm.xlu0 %95, %v54
    %v97 = vpop.permute.xlu0 %96
    %100 = vset.pattern.permute.xlu0 0
    %101 = vperm.xlu0 %100, %v55
    %v102 = vpop.permute.xlu0 %101
    %105 = vset.pattern.permute.xlu0 0
    %106 = vperm.xlu0 %105, %v56
    %v107 = vpop.permute.xlu0 %106
    %110 = vset.pattern.permute.xlu0 0
    %111 = vperm.xlu0 %110, %v57
    %v112 = vpop.permute.xlu0 %111
    %115 = vset.pattern.permute.xlu0 0
    %116 = vperm.xlu0 %115, %v58
    %v117 = vpop.permute.xlu0 %116
    %120 = vset.pattern.permute.xlu0 0
    %121 = vperm.xlu0 %120, %v59
    %v122 = vpop.permute.xlu0 %121
    %125 = vset.pattern.permute.xlu0 0
    %126 = vperm.xlu0 %125, %v60
    %v127 = vpop.permute.xlu0 %126
    %130 = vset.pattern.permute.xlu0 0
    %131 = vperm.xlu0 %130, %v61
    %v132 = vpop.permute.xlu0 %131
    %135 = vset.pattern.permute.xlu0 0
    %136 = vperm.xlu0 %135, %v62
    %v137 = vpop.permute.xlu0 %136
    %140 = vset.pattern.permute.xlu0 0
    %141 = vperm.xlu0 %140, %v63
    %v142 = vpop.permute.xlu0 %141
    %v160 = vunpack.c.l.b16 %v32
    %v161 = vunpack.c.l.b16 %v33
    %v162 = vunpack.c.l.b16 %v34
    %v163 = vunpack.c.l.b16 %v35
    %v164 = vunpack.c.l.b16 %v36
    %v165 = vunpack.c.l.b16 %v37
    %v166 = vunpack.c.l.b16 %v38
    %v167 = vunpack.c.l.b16 %v39
    %v168 = vunpack.c.l.b16 %v40
    %v169 = vunpack.c.l.b16 %v41
    %v170 = vunpack.c.l.b16 %v42
    %v171 = vunpack.c.l.b16 %v43
    %v172 = vunpack.c.l.b16 %v44
    %v173 = vunpack.c.l.b16 %v45
    %v174 = vunpack.c.l.b16 %v46
    %v175 = vunpack.c.l.b16 %v47
    %v176 = vpack.c.b16 %v161, %v160
    %v177 = vpack.c.b16 %v163, %v162
    %v178 = vpack.c.b16 %v165, %v164
    %v179 = vpack.c.b16 %v167, %v166
    %v180 = vpack.c.b16 %v169, %v168
    %v181 = vpack.c.b16 %v171, %v170
    %v182 = vpack.c.b16 %v173, %v172
    %v183 = vpack.c.b16 %v175, %v174
    %vm184 = vcmask 261120
    %v186 = vsel %vm184, %v176, 0
    %v189 = vsel %vm184, %v177, 0
    %v192 = vsel %vm184, %v178, 0
    %v195 = vsel %vm184, %v179, 0
    %v198 = vsel %vm184, %v180, 0
    %v201 = vsel %vm184, %v181, 0
    %v204 = vsel %vm184, %v182, 0
    %v207 = vsel %vm184, %v183, 0
    %v210 = vsel %vm184, %v31, 0
    %212 = vmatpush.bf16.xpose.msra.mxu0 0
    %213 = vmatpush.bf16.xpose.msra.mxu0 0
    %214 = vmatpush.bf16.xpose.msra.mxu0 0
    %215 = vmatpush.bf16.xpose.msra.mxu0 0
    %216 = vmatpush.bf16.xpose.msra.mxu0 0
    %217 = vmatpush.bf16.xpose.msra.mxu0 0
    %218 = vmatpush.bf16.xpose.msra.mxu0 0
    %219 = vmatpush.bf16.xpose.msra.mxu0 %v210
    %220 = vmatmul.bf16.gmra.mxu0 %v186
    %v221 = vpop.f32.mrf.mxu0
    %v222 = vadd.f32 %v67, %v221
    %v223 = vpop.f32.mrf.mxu0
    %v224 = vadd.f32 %v72, %v223
    %225 = vmatmul.bf16.gmra.mxu0 %v189
    %v226 = vpop.f32.mrf.mxu0
    %v227 = vadd.f32 %v77, %v226
    %v228 = vpop.f32.mrf.mxu0
    %v229 = vadd.f32 %v82, %v228
    %230 = vmatmul.bf16.gmra.mxu0 %v192
    %v231 = vpop.f32.mrf.mxu0
    %v232 = vadd.f32 %v87, %v231
    %v233 = vpop.f32.mrf.mxu0
    %v234 = vadd.f32 %v92, %v233
    %235 = vmatmul.bf16.gmra.mxu0 %v195
    %v236 = vpop.f32.mrf.mxu0
    %v237 = vadd.f32 %v97, %v236
    %v238 = vpop.f32.mrf.mxu0
    %v239 = vadd.f32 %v102, %v238
    %240 = vmatmul.bf16.gmra.mxu0 %v198
    %v241 = vpop.f32.mrf.mxu0
    %v242 = vadd.f32 %v107, %v241
    %v243 = vpop.f32.mrf.mxu0
    %v244 = vadd.f32 %v112, %v243
    %245 = vmatmul.bf16.gmra.mxu0 %v201
    %v246 = vpop.f32.mrf.mxu0
    %v247 = vadd.f32 %v117, %v246
    %v248 = vpop.f32.mrf.mxu0
    %v249 = vadd.f32 %v122, %v248
    %250 = vmatmul.bf16.gmra.mxu0 %v204
    %v251 = vpop.f32.mrf.mxu0
    %v252 = vadd.f32 %v127, %v251
    %v253 = vpop.f32.mrf.mxu0
    %v254 = vadd.f32 %v132, %v253
    %255 = vmatmul.bf16.gmra.mxu0 %v207
    %v256 = vpop.f32.mrf.mxu0
    %v257 = vadd.f32 %v137, %v256
    %v258 = vpop.f32.mrf.mxu0
    %v259 = vadd.f32 %v142, %v258
    %260 = vdwg.mxu0
    %vm261 = vcmp.gt.f32.partialorder %v222, 0.0
    %vm262 = vcmp.gt.f32.partialorder %v224, 0.0
    %vm263 = vcmp.gt.f32.partialorder %v227, 0.0
    %vm264 = vcmp.gt.f32.partialorder %v229, 0.0
    %vm265 = vcmp.gt.f32.partialorder %v232, 0.0
    %vm266 = vcmp.gt.f32.partialorder %v234, 0.0
    %vm267 = vcmp.gt.f32.partialorder %v237, 0.0
    %vm268 = vcmp.gt.f32.partialorder %v239, 0.0
    %vm269 = vcmp.gt.f32.partialorder %v242, 0.0
    %vm270 = vcmp.gt.f32.partialorder %v244, 0.0
    %vm271 = vcmp.gt.f32.partialorder %v247, 0.0
    %vm272 = vcmp.gt.f32.partialorder %v249, 0.0
    %vm273 = vcmp.gt.f32.partialorder %v252, 0.0
    %vm274 = vcmp.gt.f32.partialorder %v254, 0.0
    %vm275 = vcmp.gt.f32.partialorder %v257, 0.0
    %vm276 = vcmp.gt.f32.partialorder %v259, 0.0
    %v277 = vmul.f32 %v222, 0.01
    %v278 = vmul.f32 %v224, 0.01
    %v279 = vmul.f32 %v227, 0.01
    %v280 = vmul.f32 %v229, 0.01
    %v281 = vmul.f32 %v232, 0.01
    %v282 = vmul.f32 %v234, 0.01
    %v283 = vmul.f32 %v237, 0.01
    %v284 = vmul.f32 %v239, 0.01
    %v285 = vmul.f32 %v242, 0.01
    %v286 = vmul.f32 %v244, 0.01
    %v287 = vmul.f32 %v247, 0.01
    %v288 = vmul.f32 %v249, 0.01
    %v289 = vmul.f32 %v252, 0.01
    %v290 = vmul.f32 %v254, 0.01
    %v291 = vmul.f32 %v257, 0.01
    %v292 = vmul.f32 %v259, 0.01
    %v293 = vsel %vm261, %v222, %v277
    %v294 = vsel %vm262, %v224, %v278
    %v295 = vsel %vm263, %v227, %v279
    %v296 = vsel %vm264, %v229, %v280
    %v297 = vsel %vm265, %v232, %v281
    %v298 = vsel %vm266, %v234, %v282
    %v299 = vsel %vm267, %v237, %v283
    %v300 = vsel %vm268, %v239, %v284
    %v301 = vsel %vm269, %v242, %v285
    %v302 = vsel %vm270, %v244, %v286
    %v303 = vsel %vm271, %v247, %v287
    %v304 = vsel %vm272, %v249, %v288
    %v305 = vsel %vm273, %v252, %v289
    %v306 = vsel %vm274, %v254, %v290
    %v307 = vsel %vm275, %v257, %v291
    %v308 = vsel %vm276, %v259, %v292
    %v309 = vld [vmem:[%s3] sm:$0xf]
    %v310 = vld [vmem:[%s3 + $0x4] sm:$0xf]
    %v311 = vld [vmem:[%s3 + $0x8] sm:$0xf]
    %v312 = vld [vmem:[%s3 + $0xc] sm:$0xf]
    %v313 = vld [vmem:[%s3 + $0x10] sm:$0xf]
    %v314 = vld [vmem:[%s3 + $0x14] sm:$0xf]
    %v315 = vld [vmem:[%s3 + $0x18] sm:$0xf]
    %v316 = vld [vmem:[%s3 + $0x1c] sm:$0xf]
    %v317 = vpack.c.bf16 %v294, %v293
    %v318 = vpack.c.bf16 %v296, %v295
    %v319 = vpack.c.bf16 %v298, %v297
    %v320 = vpack.c.bf16 %v300, %v299
    %v321 = vpack.c.bf16 %v302, %v301
    %v322 = vpack.c.bf16 %v304, %v303
    %v323 = vpack.c.bf16 %v306, %v305
    %v324 = vpack.c.bf16 %v308, %v307
    %v325 = vld [vmem:[%s4] sm:$0xff]
    %v326 = vld [vmem:[%s4 + $0x8] sm:$0xff]
    %v327 = vld [vmem:[%s4 + $0x10] sm:$0xff]
    %v328 = vld [vmem:[%s4 + $0x18] sm:$0xff]
    %v329 = vld [vmem:[%s4 + $0x20] sm:$0xff]
    %v330 = vld [vmem:[%s4 + $0x28] sm:$0xff]
    %v331 = vld [vmem:[%s4 + $0x30] sm:$0xff]
    %v332 = vld [vmem:[%s4 + $0x38] sm:$0xff]
    %334 = vset.pattern.permute.xlu0 0
    %335 = vperm.xlu0 %334, %v325
    %v336 = vpop.permute.xlu0 %335
    %339 = vset.pattern.permute.xlu0 0
    %340 = vperm.xlu0 %339, %v326
    %v341 = vpop.permute.xlu0 %340
    %344 = vset.pattern.permute.xlu0 0
    %345 = vperm.xlu0 %344, %v327
    %v346 = vpop.permute.xlu0 %345
    %349 = vset.pattern.permute.xlu0 0
    %350 = vperm.xlu0 %349, %v328
    %v351 = vpop.permute.xlu0 %350
    %354 = vset.pattern.permute.xlu0 0
    %355 = vperm.xlu0 %354, %v329
    %v356 = vpop.permute.xlu0 %355
    %359 = vset.pattern.permute.xlu0 0
    %360 = vperm.xlu0 %359, %v330
    %v361 = vpop.permute.xlu0 %360
    %364 = vset.pattern.permute.xlu0 0
    %365 = vperm.xlu0 %364, %v331
    %v366 = vpop.permute.xlu0 %365
    %369 = vset.pattern.permute.xlu0 0
    %370 = vperm.xlu0 %369, %v332
    %v371 = vpop.permute.xlu0 %370
    %v381 = vunpack.c.l.b16 %v309
    %v382 = vunpack.c.l.b16 %v310
    %v383 = vunpack.c.l.b16 %v311
    %v384 = vunpack.c.l.b16 %v312
    %v385 = vunpack.c.l.b16 %v313
    %v386 = vunpack.c.l.b16 %v314
    %v387 = vunpack.c.l.b16 %v315
    %v388 = vunpack.c.l.b16 %v316
    %v389 = vpack.c.b16 %v382, %v381
    %v390 = vpack.c.b16 %v384, %v383
    %v391 = vpack.c.b16 %v386, %v385
    %v392 = vpack.c.b16 %v388, %v387
    %397 = vmatpush.bf16.msra.mxu0 %v324
    %398 = vmatpush.bf16.msra.mxu0 %v323
    %399 = vmatpush.bf16.msra.mxu0 %v322
    %400 = vmatpush.bf16.msra.mxu0 %v321
    %401 = vmatpush.bf16.msra.mxu0 %v320
    %402 = vmatpush.bf16.msra.mxu0 %v319
    %403 = vmatpush.bf16.msra.mxu0 %v318
    %404 = vmatpush.bf16.msra.mxu0 %v317
    %405 = vmatmul.bf16.gmra.mxu0 %v389
    %v406 = vpop.f32.mrf.mxu0
    %v407 = vadd.f32 %v336, %v406
    %v408 = vpop.f32.mrf.mxu0
    %v409 = vadd.f32 %v341, %v408
    %410 = vmatmul.bf16.gmra.mxu0 %v390
    %v411 = vpop.f32.mrf.mxu0
    %v412 = vadd.f32 %v346, %v411
    %v413 = vpop.f32.mrf.mxu0
    %v414 = vadd.f32 %v351, %v413
    %415 = vmatmul.bf16.gmra.mxu0 %v391
    %v416 = vpop.f32.mrf.mxu0
    %v417 = vadd.f32 %v356, %v416
    %v418 = vpop.f32.mrf.mxu0
    %v419 = vadd.f32 %v361, %v418
    %420 = vmatmul.bf16.gmra.mxu0 %v392
    %v421 = vpop.f32.mrf.mxu0
    %v422 = vadd.f32 %v366, %v421
    %v423 = vpop.f32.mrf.mxu0
    %v424 = vadd.f32 %v371, %v423
    %425 = vdwg.mxu0
    %vm426 = vcmp.gt.f32.partialorder %v407, 0.0
    %vm427 = vcmp.gt.f32.partialorder %v409, 0.0
    %vm428 = vcmp.gt.f32.partialorder %v412, 0.0
    %vm429 = vcmp.gt.f32.partialorder %v414, 0.0
    %vm430 = vcmp.gt.f32.partialorder %v417, 0.0
    %vm431 = vcmp.gt.f32.partialorder %v419, 0.0
    %vm432 = vcmp.gt.f32.partialorder %v422, 0.0
    %vm433 = vcmp.gt.f32.partialorder %v424, 0.0
    %v434 = vmul.f32 %v407, 0.01
    %v435 = vmul.f32 %v409, 0.01
    %v436 = vmul.f32 %v412, 0.01
    %v437 = vmul.f32 %v414, 0.01
    %v438 = vmul.f32 %v417, 0.01
    %v439 = vmul.f32 %v419, 0.01
    %v440 = vmul.f32 %v422, 0.01
    %v441 = vmul.f32 %v424, 0.01
    %v442 = vsel %vm426, %v407, %v434
    %v443 = vsel %vm427, %v409, %v435
    %v444 = vsel %vm428, %v412, %v436
    %v445 = vsel %vm429, %v414, %v437
    %v446 = vsel %vm430, %v417, %v438
    %v447 = vsel %vm431, %v419, %v439
    %v448 = vsel %vm432, %v422, %v440
    %v449 = vsel %vm433, %v424, %v441
    %v450 = vld [vmem:[%s5] sm:$0x1]
    %v451 = vld [vmem:[#allocation2] sm:$0x1]
    %453 = vset.pattern.permute.xlu0 0
    %454 = vperm.xlu0 %453, %v451
    %v455 = vpop.permute.xlu0 %454
    %v457 = vperm.slane %v455, 0
    %vm458 = vcmask 523264
    %v460 = vsel %vm458, %v450, 0
    %462 = vmatpush.msra.mxu0 0.0
    %463 = vmatpush.msra.mxu0 0.0
    %464 = vmatpush.msra.mxu0 0.0
    %465 = vmatpush.msra.mxu0 0.0
    %466 = vmatpush.msra.mxu0 0.0
    %467 = vmatpush.msra.mxu0 0.0
    %468 = vmatpush.msra.mxu0 0.0
    %469 = vmatpush.msra.mxu0 0.0
    %470 = vmatpush.msra.mxu0 %v449
    %471 = vmatpush.msra.mxu0 %v448
    %472 = vmatpush.msra.mxu0 %v447
    %473 = vmatpush.msra.mxu0 %v446
    %474 = vmatpush.msra.mxu0 %v445
    %475 = vmatpush.msra.mxu0 %v444
    %476 = vmatpush.msra.mxu0 %v443
    %477 = vmatpush.msra.mxu0 %v442
    %478 = vmatmul.f32.gmra.mxu0 %v460
    %v479 = vpop.f32.mrf.mxu0
    %v480 = vadd.f32 %v457, %v479
    %481 = vdwg.mxu0
    %v482 = vmax.f32 %v480, 0.0
    %v483 = vand.u32 2147483647, %v480
    %v484 = vsub.f32 0.0, %v483
    %v485 = vmul.f32 %v484, 1.442695
    %v486 = vpow.pop %v485
    %v487 = vadd.f32 %v486, 1.0
    %vm488 = vcmp.eq.f32.partialorder %v487, 1.0
    %v489 = vsub.f32 %v487, 1.0
    %v490 = vsel %vm488, 1.0, %v489
    %v491 = vlog2.pop %v487
    %v492 = vmul.f32 %v491, 0.6931472
    %v493 = vrcp.pop %v490
    %v494 = vmul.f32 %v490, %v493
    %v495 = vsub.f32 1.0, %v494
    %v496 = vmul.f32 %v493, %v495
    %v497 = vadd.f32 %v493, %v496
    %vm498 = vweird.f32 %v490
    %vm499 = vweird.f32 %v493
    %vm500 = vmor %vm498, %vm499
    %v501 = vsel %vm500, %v493, %v497
    %v502 = vand.u32 2147483647, %v490
    %vm503 = vcmp.eq.f32.partialorder %v502, 8.507059e+37
    %v504 = vand.u32 %v490, 2147483648
    %v505 = vor.u32 1.1754944e-38, %v504
    %v506 = vsel %vm503, %v505, %v501
    %v507 = vmul.f32 %v486, %v506
    %v508 = vmul.f32 %v492, %v507
    %v509 = vsel %vm488, %v486, %v508
    %v510 = vadd.f32 %v482, %v509
    %v511 = vsub.f32 0.0, %v510
    %v512 = vsub.f32 %v480, %v510
    %v514 = vrot.slane %v512, 7
    %vm516 = vcmask 1040384
    %v517 = vsel %vm516, %v511, %v514
    %vm518 = vcmask 58368
    %519 = vst.msk [vmem:[#allocation3] sm:$0x3] %vm518, %v517
    // Predicated region
    $region30: #{tpu_custom_call.1} parent=1 // pred_check
      _
    $region31: #{tpu_custom_call.1} parent=1 // pred_check_branch
      %521 = sbr.rel (0) target = $region33
    $region32: #{tpu_custom_call.1} parent=1 // pred_region
      %523 = vsyncadd [#allocation4], 0
      %s525 = sshll.u32 [#allocation3], 4
      %s526 = int_to_ptr.vmem [resolvable:$true] %s525
      %s527 = sshll.u32 %s7, 4
      %s528 = int_to_ptr.hbm [resolvable:$true] %s527
      %530 = dma.vmem_to_hbm [thread:$0]  %s526, 32, %s528, [#allocation4]
    $region33: #{tpu_custom_call.1} parent=1 // pred_fallthru
      _
    // Predicated region
    $region34: #{tpu_custom_call.1} parent=1 // pred_check
      _
    $region35: #{tpu_custom_call.1} parent=1 // pred_check_branch
      %532 = sbr.rel (0) target = $region37
    $region36: #{tpu_custom_call.1} parent=1 // pred_region
      %534 = dma.done [#allocation4], 32
    $region37: #{tpu_custom_call.1} parent=1 // pred_fallthru
      _
    %535 = vsyncpa [#allocation4], 1

</llo_original>
